<compile_context>
chip_gen: v7x
topology: tpu7x:2x2x1
jax: 0.10.0
libtpu: 0.0.40
codegen_flags: <defaults>
</compile_context>

<pallas_src>
import functools

import jax
import jax.numpy as jnp
from jax.experimental import pallas as pl
from jax.experimental.pallas import tpu as pltpu


_BLOCK_BYTES = 2 * 1024 * 1024   # ~2 MiB per block; x4 pipeline buffers = 8 MiB
_LANES = (512, 256, 128)         # lane-dense candidates (multiples of 128)


def _round_up(n, m):
    return ((n + m - 1) // m) * m


def _sublane(dtype):
    # Minimum second-minor tile per dtype packing (f32: 8, bf16: 16, int8: 32).
    return {4: 8, 2: 16, 1: 32}.get(jnp.dtype(dtype).itemsize, 8)


def _choose_layout(total, dtype):
    """Pick (lane, rows_p, tile_r, needs_pad) for a lane-dense (rows, lane) slab.

    Prefers a lane width that divides `total` exactly and a row tile that
    divides the row count, so the reshape is a free bitcast and no pad / slice
    copies are emitted around the kernel."""
    sub = _sublane(dtype)
    itemsize = jnp.dtype(dtype).itemsize
    for lane in _LANES:
        if total % lane:
            continue
        rows = total // lane
        max_rows = max(sub, (_BLOCK_BYTES // (lane * itemsize)) // sub * sub)
        if rows <= max_rows:
            return lane, rows, rows, False          # single full-array block
        # Largest divisor of rows that is a sublane multiple and <= max_rows.
        t = max_rows
        while t >= 128:                              # avoid pathologically tiny tiles
            if rows % t == 0:
                return lane, rows, t, False
            t -= sub
    # Ragged fallback: pad to (rows_p, 512); padding is inert and sliced off.
    lane = _LANES[0]
    rows = -(-total // lane)
    max_rows = max(sub, (_BLOCK_BYTES // (lane * itemsize)) // sub * sub)
    tile_r = min(max_rows, _round_up(rows, sub))
    rows_p = _round_up(rows, tile_r)
    return lane, rows_p, tile_r, True


def _prelu_collapsed_kernel(m_ref, x_ref, o_ref):
    """y = x if x >= 0 else m*x, with m the collapsed n-layer PReLU slope.

    m_ref : SMEM f32-compatible [1]
    x_ref : VMEM [tile_r, lane]
    o_ref : VMEM [tile_r, lane]
    """
    x = x_ref[...]
    o_ref[...] = jnp.where(x >= 0, x, m_ref[0] * x)


def mapping_forward(x, alphas):
    """Pallas implementation of `mapping.forward`.

    x      : f32[N, C, H, W]
    alphas : f32[n_layers]  per-layer PReLU negative slope (nn.PReLU() default 0.25)
    """
    # TODO(synk): if any PReLU were built with num_parameters=C (per-channel
    # slopes) the scalar-slope collapse would need a per-row channel index; the
    # module as written uses the scalar default.
    orig_shape = x.shape
    total = x.size
    n_layers = int(alphas.shape[0])
    dtype = x.dtype
    itemsize = jnp.dtype(dtype).itemsize

    # Collapse the layer-by-layer chain into a single scalar slope m.
    # Exact recurrence (strict m > 0 test): m = 1; m = m*a_i while m > 0.
    m = jnp.ones((), dtype=jnp.float32)
    for i in range(n_layers):
        m = jnp.where(m > 0, m * alphas[i].astype(jnp.float32), m)
    m = m.astype(dtype).reshape(1)

    lane, rows_p, tile_r, needs_pad = _choose_layout(total, dtype)

    flat = x.reshape(-1)
    if needs_pad:
        flat = jnp.pad(flat, (0, rows_p * lane - total))
    x2 = flat.reshape(rows_p, lane)

    out2 = pl.pallas_call(
        _prelu_collapsed_kernel,
        out_shape=jax.ShapeDtypeStruct((rows_p, lane), dtype),
        grid=(rows_p // tile_r,),
        in_specs=[
            pl.BlockSpec(memory_space=pltpu.MemorySpace.SMEM),   # m (scalar slope)
            pl.BlockSpec((tile_r, lane), lambda i: (i, 0)),      # input tile
        ],
        out_specs=pl.BlockSpec((tile_r, lane), lambda i: (i, 0)),
        # Alias slab in->out only when we made a fresh padded copy; when the
        # slab is a pure bitcast of the (non-donated) caller input, aliasing
        # would force XLA to insert a full extra HBM copy instead of saving one.
        input_output_aliases={1: 0} if needs_pad else {},
        cost_estimate=pl.CostEstimate(
            flops=2 * rows_p * lane,
            transcendentals=0,
            bytes_accessed=2 * rows_p * lane * itemsize),
        # TODO(synk): on v7x (2 TensorCores/chip) switch this axis to
        # pltpu.CORE_PARALLEL to shard the stream across both cores.
        compiler_params=pltpu.CompilerParams(
            dimension_semantics=("parallel",)),
    )(m, x2)

    out = out2.reshape(-1)
    if needs_pad:
        out = out[:total]
    return out.reshape(orig_shape)


def mapping_reference(x, alphas):
    """Pure-JAX reference matching the (PReLU-only) stack semantics layer by layer."""
    y = x
    for i in range(alphas.shape[0]):
        a = alphas[i]
        y = jnp.where(y >= 0, y, a * y)
    return y


if __name__ == "__main__":
    key = jax.random.PRNGKey(0)

    # Small shapes consistent with a Conv2d(out2, out2, 3, padding=1) mapping block.
    N, C, H, W = 2, 4, 16, 16       # out2 = 4 channels
    n_layers = 3

    x = jax.random.normal(key, (N, C, H, W), dtype=jnp.float32)
    alphas = jnp.full((n_layers,), 0.25, dtype=jnp.float32)   # nn.PReLU() default

    out = jax.block_until_ready(mapping_forward(x, alphas))
    ref = mapping_reference(x, alphas)
    assert out.shape == (N, C, H, W)
    assert jnp.allclose(out, ref, atol=1e-6, rtol=1e-5)

    # Ragged-size + mixed-sign-alpha check: exercises the pad fallback and the
    # strict m > 0 collapse recurrence.
    xr = jax.random.normal(jax.random.PRNGKey(1), (1, 3, 7, 5), dtype=jnp.float32)
    alphas_r = jnp.asarray([0.25, -0.5, 0.1], dtype=jnp.float32)
    out_r = jax.block_until_ready(mapping_forward(xr, alphas_r))
    assert out_r.shape == xr.shape
    assert jnp.allclose(out_r, mapping_reference(xr, alphas_r), atol=1e-6, rtol=1e-5)

    print("KERNEL_OK")
</pallas_src>

<mosaic_0001>
module attributes {stable_mosaic.version = 11 : i64} {
  func.func @_prelu_collapsed_kernel(%arg0: i32, %arg1: memref<1xf32, #tpu.memory_space<smem>>, %arg2: memref<4x512xf32, #tpu.memory_space<vmem>>, %arg3: memref<4x512xf32, #tpu.memory_space<vmem>>) attributes {dimension_semantics = [#tpu.dimension_semantics<parallel>], iteration_bounds = array<i64: 1>, scalar_prefetch = 0 : i64, scratch_operands = 0 : i64, tpu.core_type = #tpu.core_type<tc>, window_params = [{transform_indices = @transform_0, window_bounds = array<i64: 1>}, {transform_indices = @transform_1, window_bounds = array<i64: 4, 512>}, {transform_indices = @transform_2, window_bounds = array<i64: 4, 512>}]} {
    %c0 = arith.constant 0 : index
    %c0_0 = arith.constant 0 : index
    %0 = vector.load %arg2[%c0, %c0_0] : memref<4x512xf32, #tpu.memory_space<vmem>>, vector<4x512xf32>
    %cst = arith.constant 0.000000e+00 : f32
    %1 = vector.broadcast %cst : f32 to vector<4x512xf32>
    %2 = arith.cmpf oge, %0, %1 : vector<4x512xf32>
    %c0_1 = arith.constant 0 : index
    %3 = memref.load %arg1[%c0_1] : memref<1xf32, #tpu.memory_space<smem>>
    %4 = vector.broadcast %3 : f32 to vector<4x512xf32>
    %5 = arith.mulf %4, %0 : vector<4x512xf32>
    %6 = arith.select %2, %0, %5 : vector<4x512xi1>, vector<4x512xf32>
    %c0_2 = arith.constant 0 : index
    %c0_3 = arith.constant 0 : index
    %7 = vector.load %arg3[%c0_2, %c0_3] : memref<4x512xf32, #tpu.memory_space<vmem>>, vector<4x512xf32>
    tpu.vector_store %arg3[%c0_2, %c0_3], %6 {strides = array<i32>} : memref<4x512xf32, #tpu.memory_space<vmem>>, vector<4x512xf32>,
    return
  }
  func.func @transform_0(%arg0: i32) -> i32 {
    %c0_i32 = arith.constant 0 : i32
    %c0_i32_0 = arith.constant 0 : i32
    return %c0_i32 : i32
  }
  func.func @transform_1(%arg0: i32) -> (i32, i32) {
    %c0_i32 = arith.constant 0 : i32
    %c0_i32_0 = arith.constant 0 : i32
    return %arg0, %c0_i32 : i32, i32
  }
  func.func @transform_2(%arg0: i32) -> (i32, i32) {
    %c0_i32 = arith.constant 0 : i32
    %c0_i32_0 = arith.constant 0 : i32
    return %arg0, %c0_i32 : i32, i32
  }
}

</mosaic_0001>

<llo_original>
// kernel: tpu_custom_call.1
$region0: #{tpu_custom_call.1}
  #allocation0 [shape = 'u32[]', space=smem, size = 0x4, offset = 0x4, fixed_abs, tag = 'smem constant byte address 0x4 - core index']
  #allocation1 [shape = 'u32[144,128]{1,0:T(1,128)}', space=vmem, size = 0x12000, scoped, tag = 'internal scratch']
  #allocation2 [shape = 'f32[1]{0:T(128)S(6)}', space=smem, size = 0x200, scoped, tag = 'scoped memory for tpu_custom_call.1']
  %s0 = inlined_call_operand.<no memory space> [shape: f32[1], index: 0, kind: input, shape index: {}]
  %s1 = inlined_call_operand.hbm [shape: f32[4,512], index: 1, kind: input, shape index: {}]
  %s2 = inlined_call_operand.hbm [shape: f32[4,512], index: 2, kind: output, shape index: {}]
  %s3 = sld [smem:[#allocation0]]
  $region22: #{tpu_custom_call.1} parent=0
    _
  %s5 = ssub.s32 1, %s3
  %s6 = scalar_select 0, %s5, %s3
  %7 = sst [smem:[#allocation2]] %s0
  $region1: #{tpu_custom_call.1} parent=0
    #allocation3 [shape = 'u8[8192]{0}', space=vmem, size = 0x2000, scoped, tag = 'input window, operand 1, single buffered']
    #allocation4 [shape = 's32[1]{0}', space=sflag, size = 0x4, scoped, tag = 'scoped memory for tpu_custom_call.1']
    #allocation5 [shape = 's32[1]{0}', space=sflag, size = 0x4, scoped, tag = 'scoped memory for tpu_custom_call.1']
    #allocation6 [shape = 'u8[8192]{0}', space=vmem, size = 0x2000, scoped, tag = 'output window, operand 0, single buffered']
    %8 = vsyncpa [#allocation4], 0
    %9 = vsyncpa [#allocation5], 0
    // Predicated region
    $region2: #{tpu_custom_call.1} parent=1 // pred_check
      _
    $region3: #{tpu_custom_call.1} parent=1 // pred_check_branch
      %11 = sbr.rel (0) target = $region5
    $region4: #{tpu_custom_call.1} parent=1 // pred_region
      _
    $region5: #{tpu_custom_call.1} parent=1 // pred_fallthru
      _
    // Predicated region
    $region6: #{tpu_custom_call.1} parent=1 // pred_check
      _
    $region7: #{tpu_custom_call.1} parent=1 // pred_check_branch
      %13 = sbr.rel (0) target = $region9
    $region8: #{tpu_custom_call.1} parent=1 // pred_region
      %s15 = ssub.s32 256, 256
      %16 = vsyncadd [#allocation4], %s15
      %s18 = sshll.u32 [#allocation3], 4
      %s19 = int_to_ptr.vmem [resolvable:$true] %s18
      %21 = dma.hbm_to_vmem [thread:$0]  %s1, 256, %s19, [#allocation4]
    $region9: #{tpu_custom_call.1} parent=1 // pred_fallthru
      _
    // Predicated region
    $region10: #{tpu_custom_call.1} parent=1 // pred_check
      _
    $region11: #{tpu_custom_call.1} parent=1 // pred_check_branch
      %23 = sbr.rel (0) target = $region13
    $region12: #{tpu_custom_call.1} parent=1 // pred_region
      %24 = dma.done [#allocation4], 256
    $region13: #{tpu_custom_call.1} parent=1 // pred_fallthru
      _
    %v25 = vld [vmem:[#allocation3] sm:$0xff]
    %v26 = vld [vmem:[#allocation3 + $0x8] sm:$0xff]
    %vm27 = vcmp.ge.f32.partialorder %v25, 0.0
    %vm28 = vcmp.ge.f32.partialorder %v26, 0.0
    %s29 = sld [smem:[#allocation2]]
    %v30 = vstv %s29
    %v31 = vmul.f32 %v30, %v25
    %v32 = vmul.f32 %v30, %v26
    %v33 = vsel %vm27, %v25, %v31
    %v34 = vsel %vm28, %v26, %v32
    %35 = vst [vmem:[#allocation6] sm:$0xff] %v33
    %36 = vst [vmem:[#allocation6 + $0x8] sm:$0xff] %v34
    // Predicated region
    $region14: #{tpu_custom_call.1} parent=1 // pred_check
      _
    $region15: #{tpu_custom_call.1} parent=1 // pred_check_branch
      %38 = sbr.rel (0) target = $region17
    $region16: #{tpu_custom_call.1} parent=1 // pred_region
      %s40 = ssub.s32 256, 256
      %41 = vsyncadd [#allocation5], %s40
      %s43 = sshll.u32 [#allocation6], 4
      %s44 = int_to_ptr.vmem [resolvable:$true] %s43
      %46 = dma.vmem_to_hbm [thread:$0]  %s44, 256, %s2, [#allocation5]
    $region17: #{tpu_custom_call.1} parent=1 // pred_fallthru
      _
    // Predicated region
    $region18: #{tpu_custom_call.1} parent=1 // pred_check
      _
    $region19: #{tpu_custom_call.1} parent=1 // pred_check_branch
      %48 = sbr.rel (0) target = $region21
    $region20: #{tpu_custom_call.1} parent=1 // pred_region
      %49 = dma.done [#allocation5], 256
    $region21: #{tpu_custom_call.1} parent=1 // pred_fallthru
      _
    %50 = vsyncpa [#allocation4], 1
    %51 = vsyncpa [#allocation5], 1

</llo_original>
